<compile_context>
chip_gen: v6e
topology: v6e:2x2x1
jax: 0.10.0
libtpu: 0.0.40
codegen_flags: <defaults>
</compile_context>

<pallas_src>
import jax
import jax.numpy as jnp
from jax.experimental import pallas as pl
from jax.experimental.pallas import tpu as pltpu


def _cdiv(a, b):
    return -(-a // b)


def _round_up(x, m):
    return ((x + m - 1) // m) * m


def _make_kernel(mm_dtype, d):
    """Kernel factory.  mm_dtype = MXU input dtype; d = per-embedding width."""

    def kernel(
        e1_ref, e2_ref,                      # [TILE_B, d] native dtype
        w_se1_ref,                           # [2d, hidden]    mm_dtype
        w_se2a_ref, w_se2b_ref,              # [hidden, d] x2  mm_dtype
        w_f1_ref,                            # [2d, 2d]        mm_dtype
        w_f2_ref,                            # [2d, out_dim]   mm_dtype
        bias_ref,                            # [8, 2d] f32 (rows 0..4 used)
        out_ref,                             # [TILE_B, out_dim]
    ):
        hidden = w_se1_ref.shape[1]
        chan = w_f1_ref.shape[1]
        out_dim = w_f2_ref.shape[1]

        x1 = e1_ref[...]
        x2 = e2_ref[...]
        x1_mm = x1.astype(mm_dtype)
        x2_mm = x2.astype(mm_dtype)

        # fc_se layer 1: relu([x1, x2] @ W_se1 + b_se1)    (MXU, f32 acc)
        h = jnp.dot(x1_mm, w_se1_ref[:d, :], preferred_element_type=jnp.float32)
        h += jnp.dot(x2_mm, w_se1_ref[d:, :], preferred_element_type=jnp.float32)
        h = jnp.maximum(h + bias_ref[0:1, :hidden], 0.0)
        h_mm = h.astype(mm_dtype)

        # fc_se layer 2 + sigmoid, split into the column halves gating x1 / x2.
        c1 = jax.nn.sigmoid(
            jnp.dot(h_mm, w_se2a_ref[...], preferred_element_type=jnp.float32)
            + bias_ref[1:2, :d])
        c2 = jax.nn.sigmoid(
            jnp.dot(h_mm, w_se2b_ref[...], preferred_element_type=jnp.float32)
            + bias_ref[2:3, :d])

        # SE gating with residual (f32 elementwise on the VPU).
        x1_f = x1.astype(jnp.float32)
        x2_f = x2.astype(jnp.float32)
        s1 = (c1 * x1_f + x1_f).astype(mm_dtype)
        s2 = (c2 * x2_f + x2_f).astype(mm_dtype)

        # fc1 layer 1: relu([s1, s2] @ W_f1 + b_f1)
        g = jnp.dot(s1, w_f1_ref[:d, :], preferred_element_type=jnp.float32)
        g += jnp.dot(s2, w_f1_ref[d:, :], preferred_element_type=jnp.float32)
        g = jnp.maximum(g + bias_ref[3:4, :chan], 0.0)

        # fc1 layer 2: relu(g @ W_f2 + b_f2)
        scores = jnp.dot(g.astype(mm_dtype), w_f2_ref[...],
                         preferred_element_type=jnp.float32)
        scores = jnp.maximum(scores + bias_ref[4:5, :out_dim], 0.0)

        out_ref[...] = scores.astype(out_ref.dtype)

    return kernel


def se_tensor_network(e1, e2, params, *, tile_b_max=1024, mm_dtype=jnp.float32):
    """Forward pass of SETensorNetworkModule.

    params: dict with w_se1,b_se1,w_se2,b_se2,w_f1,b_f1,w_f2,b_f2
            (weights as [in, out], biases as [1, out]).
    """
    B, D = e1.shape
    assert e2.shape == (B, D)
    assert D % 8 == 0, "per-embedding width must be a multiple of 8 sublanes"
    channel = 2 * D
    hidden = channel // 4
    out_dim = D // 2
    out_dtype = e1.dtype

    # ---- balanced batch tiling (minimal padding, >=2 grid steps when there is
    # enough work so v7x's two TensorCores both run) ---------------------------
    row_align = 16 if mm_dtype == jnp.bfloat16 else 8
    num_tiles = max(_cdiv(B, tile_b_max), 1)
    if num_tiles < 2 and B >= 2 * row_align:
        num_tiles = 2
    tile_b = _round_up(_cdiv(B, num_tiles), row_align)
    num_tiles = _cdiv(B, tile_b)
    padded_b = tile_b * num_tiles

    if padded_b != B:
        e1_p = jnp.pad(e1, ((0, padded_b - B), (0, 0)))
        e2_p = jnp.pad(e2, ((0, padded_b - B), (0, 0)))
    else:
        e1_p, e2_p = e1, e2

    # ---- weights at native shapes; W_se2 / b_se2 pre-split by output half so
    # the kernel never slices lanes ------------------------------------------
    w_se1 = params["w_se1"].astype(mm_dtype)               # (2D, hidden)
    w_se2 = params["w_se2"].astype(mm_dtype)               # (hidden, 2D)
    w_se2_a = w_se2[:, :D]
    w_se2_b = w_se2[:, D:]
    w_f1 = params["w_f1"].astype(mm_dtype)                 # (2D, 2D)
    w_f2 = params["w_f2"].astype(mm_dtype)                 # (2D, out_dim)

    # ---- all biases packed into one (8, 2D) f32 array (rows 0..4 used) ------
    bias_pack = jnp.zeros((8, channel), jnp.float32)
    bias_pack = bias_pack.at[0, :hidden].set(params["b_se1"][0].astype(jnp.float32))
    bias_pack = bias_pack.at[1, :D].set(params["b_se2"][0, :D].astype(jnp.float32))
    bias_pack = bias_pack.at[2, :D].set(params["b_se2"][0, D:].astype(jnp.float32))
    bias_pack = bias_pack.at[3, :channel].set(params["b_f1"][0].astype(jnp.float32))
    bias_pack = bias_pack.at[4, :out_dim].set(params["b_f2"][0].astype(jnp.float32))

    grid = (num_tiles,)

    act_spec = pl.BlockSpec((tile_b, D), lambda i: (i, 0))
    out_spec = pl.BlockSpec((tile_b, out_dim), lambda i: (i, 0))

    def const_spec(shape):
        return pl.BlockSpec(shape, lambda i: (0, 0))       # VMEM-resident

    # ---- advisory cost estimate: what the call actually moves / computes ----
    mm_isz = jnp.dtype(mm_dtype).itemsize
    act_isz = jnp.dtype(e1_p.dtype).itemsize + jnp.dtype(e2_p.dtype).itemsize
    weight_bytes = (w_se1.size + w_se2_a.size + w_se2_b.size
                    + w_f1.size + w_f2.size) * mm_isz + bias_pack.size * 4
    flops = 2 * padded_b * (channel * hidden + hidden * channel
                            + channel * channel + channel * out_dim)
    bytes_accessed = (padded_b * D * act_isz
                      + weight_bytes
                      + padded_b * out_dim * jnp.dtype(out_dtype).itemsize)
    cost = pl.CostEstimate(flops=flops,
                           transcendentals=padded_b * channel,
                           bytes_accessed=bytes_accessed)

    out = pl.pallas_call(
        _make_kernel(mm_dtype, D),
        out_shape=jax.ShapeDtypeStruct((padded_b, out_dim), out_dtype),
        grid=grid,
        in_specs=[act_spec, act_spec,
                  const_spec((channel, hidden)),
                  const_spec((hidden, D)), const_spec((hidden, D)),
                  const_spec((channel, channel)),
                  const_spec((channel, out_dim)),
                  const_spec((8, channel))],
        out_specs=out_spec,
        compiler_params=pltpu.CompilerParams(
            dimension_semantics=("parallel",)),
        cost_estimate=cost,
    )(e1_p, e2_p, w_se1, w_se2_a, w_se2_b, w_f1, w_f2, bias_pack)

    return out[:B] if padded_b != B else out


def init_params(key, dim_size, dtype=jnp.float32):
    channel = dim_size * 2
    reduction = 4
    ks = jax.random.split(key, 8)

    def lin(kw, kb, fan_in, fan_out):
        bound = 1.0 / jnp.sqrt(fan_in)
        w = jax.random.uniform(kw, (fan_in, fan_out), dtype, -bound, bound)
        b = jax.random.uniform(kb, (1, fan_out), dtype, -bound, bound)
        return w, b

    w_se1, b_se1 = lin(ks[0], ks[1], channel, channel // reduction)
    w_se2, b_se2 = lin(ks[2], ks[3], channel // reduction, channel)
    w_f1, b_f1 = lin(ks[4], ks[5], channel, channel)
    w_f2, b_f2 = lin(ks[6], ks[7], channel, dim_size // 2)
    return dict(
        w_se1=w_se1, b_se1=b_se1, w_se2=w_se2, b_se2=b_se2,
        w_f1=w_f1, b_f1=b_f1, w_f2=w_f2, b_f2=b_f2,
    )


def reference(e1, e2, p):
    """Plain-JAX reference mirroring the torch forward."""
    combined = jnp.concatenate([e1, e2], axis=1)
    h = jnp.maximum(combined @ p["w_se1"] + p["b_se1"], 0.0)
    coefs = jax.nn.sigmoid(h @ p["w_se2"] + p["b_se2"])
    se_feat = coefs * combined + combined
    g = jnp.maximum(se_feat @ p["w_f1"] + p["b_f1"], 0.0)
    return jnp.maximum(g @ p["w_f2"] + p["b_f2"], 0.0)


if __name__ == "__main__":
    batch = 64
    dim_size = 32          # channel = 64, hidden = 16, out_dim = 16

    key = jax.random.PRNGKey(0)
    k1, k2, kp = jax.random.split(key, 3)
    e1 = jax.random.normal(k1, (batch, dim_size), jnp.float32)
    e2 = jax.random.normal(k2, (batch, dim_size), jnp.float32)
    params = init_params(kp, dim_size)

    # f32 MXU path: numerically matches the f32 reference.
    out = jax.block_until_ready(se_tensor_network(e1, e2, params))
    ref = reference(e1, e2, params)
    assert out.shape == (batch, dim_size // 2)
    assert jnp.allclose(out, ref, atol=1e-4, rtol=1e-4), \
        float(jnp.abs(out - ref).max())

    # ragged batch (exercises the minimal-padding balanced-tile path)
    out_odd = jax.block_until_ready(se_tensor_network(e1[:10], e2[:10], params))
    ref_odd = reference(e1[:10], e2[:10], params)
    assert out_odd.shape == (10, dim_size // 2)
    assert jnp.allclose(out_odd, ref_odd, atol=1e-4, rtol=1e-4)

    # bf16 MXU fast path (matmul inputs bf16, elementwise math stays f32).
    out_bf16 = jax.block_until_ready(
        se_tensor_network(e1, e2, params, mm_dtype=jnp.bfloat16))
    assert out_bf16.shape == (batch, dim_size // 2)
    assert bool(jnp.isfinite(out_bf16).all())

    print("KERNEL_OK")
</pallas_src>

<mosaic_0001>
module attributes {stable_mosaic.version = 11 : i64} {
  func.func @kernel(%arg0: i32, %arg1: memref<32x32xf32, #tpu.memory_space<vmem>>, %arg2: memref<32x32xf32, #tpu.memory_space<vmem>>, %arg3: memref<64x16xf32, #tpu.memory_space<vmem>>, %arg4: memref<16x32xf32, #tpu.memory_space<vmem>>, %arg5: memref<16x32xf32, #tpu.memory_space<vmem>>, %arg6: memref<64x64xf32, #tpu.memory_space<vmem>>, %arg7: memref<64x16xf32, #tpu.memory_space<vmem>>, %arg8: memref<8x64xf32, #tpu.memory_space<vmem>>, %arg9: memref<32x16xf32, #tpu.memory_space<vmem>>) attributes {dimension_semantics = [#tpu.dimension_semantics<parallel>], iteration_bounds = array<i64: 2>, scalar_prefetch = 0 : i64, scratch_operands = 0 : i64, tpu.core_type = #tpu.core_type<tc>, window_params = [{transform_indices = @transform_0, window_bounds = array<i64: 32, 32>}, {transform_indices = @transform_1, window_bounds = array<i64: 32, 32>}, {pipeline_mode = #tpu.pipeline_mode<synchronous>, transform_indices = @transform_2, window_bounds = array<i64: 64, 16>}, {pipeline_mode = #tpu.pipeline_mode<synchronous>, transform_indices = @transform_3, window_bounds = array<i64: 16, 32>}, {pipeline_mode = #tpu.pipeline_mode<synchronous>, transform_indices = @transform_4, window_bounds = array<i64: 16, 32>}, {pipeline_mode = #tpu.pipeline_mode<synchronous>, transform_indices = @transform_5, window_bounds = array<i64: 64, 64>}, {pipeline_mode = #tpu.pipeline_mode<synchronous>, transform_indices = @transform_6, window_bounds = array<i64: 64, 16>}, {pipeline_mode = #tpu.pipeline_mode<synchronous>, transform_indices = @transform_7, window_bounds = array<i64: 8, 64>}, {transform_indices = @transform_8, window_bounds = array<i64: 32, 16>}]} {
    %c0 = arith.constant 0 : index
    %c0_0 = arith.constant 0 : index
    %0 = vector.load %arg1[%c0, %c0_0] : memref<32x32xf32, #tpu.memory_space<vmem>>, vector<32x32xf32>
    %c0_1 = arith.constant 0 : index
    %c0_2 = arith.constant 0 : index
    %1 = vector.load %arg2[%c0_1, %c0_2] : memref<32x32xf32, #tpu.memory_space<vmem>>, vector<32x32xf32>
    %c0_3 = arith.constant 0 : index
    %c0_4 = arith.constant 0 : index
    %2 = vector.load %arg3[%c0_3, %c0_4] : memref<64x16xf32, #tpu.memory_space<vmem>>, vector<32x16xf32>
    %cst = arith.constant dense<0.000000e+00> : vector<32x16xf32>
    %3 = tpu.matmul %0, %2, %cst {dimension_numbers = #tpu.dot_dimension_numbers<[1], [0], [0], [1], [0, 0, 1, 1], [], []>} : vector<32x32xf32>, vector<32x16xf32>, vector<32x16xf32> -> vector<32x16xf32>
    %c32 = arith.constant 32 : index
    %c0_5 = arith.constant 0 : index
    %4 = vector.load %arg3[%c32, %c0_5] : memref<64x16xf32, #tpu.memory_space<vmem>>, vector<32x16xf32>
    %cst_6 = arith.constant dense<0.000000e+00> : vector<32x16xf32>
    %5 = tpu.matmul %1, %4, %cst_6 {dimension_numbers = #tpu.dot_dimension_numbers<[1], [0], [0], [1], [0, 0, 1, 1], [], []>} : vector<32x32xf32>, vector<32x16xf32>, vector<32x16xf32> -> vector<32x16xf32>
    %6 = arith.addf %3, %5 : vector<32x16xf32>
    %c0_7 = arith.constant 0 : index
    %c0_8 = arith.constant 0 : index
    %7 = vector.load %arg8[%c0_7, %c0_8] : memref<8x64xf32, #tpu.memory_space<vmem>>, vector<1x16xf32>
    %8 = vector.broadcast %7 : vector<1x16xf32> to vector<32x16xf32>
    %9 = arith.addf %6, %8 : vector<32x16xf32>
    %cst_9 = arith.constant 0.000000e+00 : f32
    %10 = vector.broadcast %cst_9 : f32 to vector<32x16xf32>
    %11 = arith.maximumf %9, %10 : vector<32x16xf32>
    %c0_10 = arith.constant 0 : index
    %c0_11 = arith.constant 0 : index
    %12 = vector.load %arg4[%c0_10, %c0_11] : memref<16x32xf32, #tpu.memory_space<vmem>>, vector<16x32xf32>
    %cst_12 = arith.constant dense<0.000000e+00> : vector<32x32xf32>
    %13 = tpu.matmul %11, %12, %cst_12 {dimension_numbers = #tpu.dot_dimension_numbers<[1], [0], [0], [1], [0, 0, 1, 1], [], []>} : vector<32x16xf32>, vector<16x32xf32>, vector<32x32xf32> -> vector<32x32xf32>
    %c1 = arith.constant 1 : index
    %c0_13 = arith.constant 0 : index
    %14 = vector.load %arg8[%c1, %c0_13] : memref<8x64xf32, #tpu.memory_space<vmem>>, vector<1x32xf32>
    %15 = vector.broadcast %14 : vector<1x32xf32> to vector<32x32xf32>
    %16 = arith.addf %13, %15 : vector<32x32xf32>
    %17 = arith.negf %16 : vector<32x32xf32>
    %18 = math.exp %17 : vector<32x32xf32>
    %cst_14 = arith.constant 1.000000e+00 : f32
    %19 = vector.broadcast %cst_14 : f32 to vector<32x32xf32>
    %20 = arith.addf %19, %18 : vector<32x32xf32>
    %21 = arith.divf %19, %20 : vector<32x32xf32>
    %c0_15 = arith.constant 0 : index
    %c0_16 = arith.constant 0 : index
    %22 = vector.load %arg5[%c0_15, %c0_16] : memref<16x32xf32, #tpu.memory_space<vmem>>, vector<16x32xf32>
    %cst_17 = arith.constant dense<0.000000e+00> : vector<32x32xf32>
    %23 = tpu.matmul %11, %22, %cst_17 {dimension_numbers = #tpu.dot_dimension_numbers<[1], [0], [0], [1], [0, 0, 1, 1], [], []>} : vector<32x16xf32>, vector<16x32xf32>, vector<32x32xf32> -> vector<32x32xf32>
    %c2 = arith.constant 2 : index
    %c0_18 = arith.constant 0 : index
    %24 = vector.load %arg8[%c2, %c0_18] : memref<8x64xf32, #tpu.memory_space<vmem>>, vector<1x32xf32>
    %25 = vector.broadcast %24 : vector<1x32xf32> to vector<32x32xf32>
    %26 = arith.addf %23, %25 : vector<32x32xf32>
    %27 = arith.negf %26 : vector<32x32xf32>
    %28 = math.exp %27 : vector<32x32xf32>
    %cst_19 = arith.constant 1.000000e+00 : f32
    %29 = vector.broadcast %cst_19 : f32 to vector<32x32xf32>
    %30 = arith.addf %29, %28 : vector<32x32xf32>
    %31 = arith.divf %29, %30 : vector<32x32xf32>
    %32 = arith.mulf %21, %0 : vector<32x32xf32>
    %33 = arith.addf %32, %0 : vector<32x32xf32>
    %34 = arith.mulf %31, %1 : vector<32x32xf32>
    %35 = arith.addf %34, %1 : vector<32x32xf32>
    %c0_20 = arith.constant 0 : index
    %c0_21 = arith.constant 0 : index
    %36 = vector.load %arg6[%c0_20, %c0_21] : memref<64x64xf32, #tpu.memory_space<vmem>>, vector<32x64xf32>
    %cst_22 = arith.constant dense<0.000000e+00> : vector<32x64xf32>
    %37 = tpu.matmul %33, %36, %cst_22 {dimension_numbers = #tpu.dot_dimension_numbers<[1], [0], [0], [1], [0, 0, 1, 1], [], []>} : vector<32x32xf32>, vector<32x64xf32>, vector<32x64xf32> -> vector<32x64xf32>
    %c32_23 = arith.constant 32 : index
    %c0_24 = arith.constant 0 : index
    %38 = vector.load %arg6[%c32_23, %c0_24] : memref<64x64xf32, #tpu.memory_space<vmem>>, vector<32x64xf32>
    %cst_25 = arith.constant dense<0.000000e+00> : vector<32x64xf32>
    %39 = tpu.matmul %35, %38, %cst_25 {dimension_numbers = #tpu.dot_dimension_numbers<[1], [0], [0], [1], [0, 0, 1, 1], [], []>} : vector<32x32xf32>, vector<32x64xf32>, vector<32x64xf32> -> vector<32x64xf32>
    %40 = arith.addf %37, %39 : vector<32x64xf32>
    %c3 = arith.constant 3 : index
    %c0_26 = arith.constant 0 : index
    %41 = vector.load %arg8[%c3, %c0_26] : memref<8x64xf32, #tpu.memory_space<vmem>>, vector<1x64xf32>
    %42 = vector.broadcast %41 : vector<1x64xf32> to vector<32x64xf32>
    %43 = arith.addf %40, %42 : vector<32x64xf32>
    %cst_27 = arith.constant 0.000000e+00 : f32
    %44 = vector.broadcast %cst_27 : f32 to vector<32x64xf32>
    %45 = arith.maximumf %43, %44 : vector<32x64xf32>
    %c0_28 = arith.constant 0 : index
    %c0_29 = arith.constant 0 : index
    %46 = vector.load %arg7[%c0_28, %c0_29] : memref<64x16xf32, #tpu.memory_space<vmem>>, vector<64x16xf32>
    %cst_30 = arith.constant dense<0.000000e+00> : vector<32x16xf32>
    %47 = tpu.matmul %45, %46, %cst_30 {dimension_numbers = #tpu.dot_dimension_numbers<[1], [0], [0], [1], [0, 0, 1, 1], [], []>} : vector<32x64xf32>, vector<64x16xf32>, vector<32x16xf32> -> vector<32x16xf32>
    %c4 = arith.constant 4 : index
    %c0_31 = arith.constant 0 : index
    %48 = vector.load %arg8[%c4, %c0_31] : memref<8x64xf32, #tpu.memory_space<vmem>>, vector<1x16xf32>
    %49 = vector.broadcast %48 : vector<1x16xf32> to vector<32x16xf32>
    %50 = arith.addf %47, %49 : vector<32x16xf32>
    %cst_32 = arith.constant 0.000000e+00 : f32
    %51 = vector.broadcast %cst_32 : f32 to vector<32x16xf32>
    %52 = arith.maximumf %50, %51 : vector<32x16xf32>
    %c0_33 = arith.constant 0 : index
    %c0_34 = arith.constant 0 : index
    %53 = vector.load %arg9[%c0_33, %c0_34] : memref<32x16xf32, #tpu.memory_space<vmem>>, vector<32x16xf32>
    tpu.vector_store %arg9[%c0_33, %c0_34], %52 {strides = array<i32>} : memref<32x16xf32, #tpu.memory_space<vmem>>, vector<32x16xf32>,
    return
  }
  func.func @transform_0(%arg0: i32) -> (i32, i32) {
    %c0_i32 = arith.constant 0 : i32
    %c0_i32_0 = arith.constant 0 : i32
    return %arg0, %c0_i32 : i32, i32
  }
  func.func @transform_1(%arg0: i32) -> (i32, i32) {
    %c0_i32 = arith.constant 0 : i32
    %c0_i32_0 = arith.constant 0 : i32
    return %arg0, %c0_i32 : i32, i32
  }
  func.func @transform_2(%arg0: i32) -> (i32, i32) {
    %c0_i32 = arith.constant 0 : i32
    %c0_i32_0 = arith.constant 0 : i32
    %c0_i32_1 = arith.constant 0 : i32
    return %c0_i32, %c0_i32_0 : i32, i32
  }
  func.func @transform_3(%arg0: i32) -> (i32, i32) {
    %c0_i32 = arith.constant 0 : i32
    %c0_i32_0 = arith.constant 0 : i32
    %c0_i32_1 = arith.constant 0 : i32
    return %c0_i32, %c0_i32_0 : i32, i32
  }
  func.func @transform_4(%arg0: i32) -> (i32, i32) {
    %c0_i32 = arith.constant 0 : i32
    %c0_i32_0 = arith.constant 0 : i32
    %c0_i32_1 = arith.constant 0 : i32
    return %c0_i32, %c0_i32_0 : i32, i32
  }
  func.func @transform_5(%arg0: i32) -> (i32, i32) {
    %c0_i32 = arith.constant 0 : i32
    %c0_i32_0 = arith.constant 0 : i32
    %c0_i32_1 = arith.constant 0 : i32
    return %c0_i32, %c0_i32_0 : i32, i32
  }
  func.func @transform_6(%arg0: i32) -> (i32, i32) {
    %c0_i32 = arith.constant 0 : i32
    %c0_i32_0 = arith.constant 0 : i32
    %c0_i32_1 = arith.constant 0 : i32
    return %c0_i32, %c0_i32_0 : i32, i32
  }
  func.func @transform_7(%arg0: i32) -> (i32, i32) {
    %c0_i32 = arith.constant 0 : i32
    %c0_i32_0 = arith.constant 0 : i32
    %c0_i32_1 = arith.constant 0 : i32
    return %c0_i32, %c0_i32_0 : i32, i32
  }
  func.func @transform_8(%arg0: i32) -> (i32, i32) {
    %c0_i32 = arith.constant 0 : i32
    %c0_i32_0 = arith.constant 0 : i32
    return %arg0, %c0_i32 : i32, i32
  }
}

</mosaic_0001>

<llo_original>
// kernel: tpu_custom_call.1
$region0: #{tpu_custom_call.1}
  #allocation0 [shape = 'u32[]', space=smem, size = 0x4, offset = 0x4, fixed_abs, tag = 'smem constant byte address 0x4 - core index']
  #allocation1 [shape = 'u32[144,128]{1,0:T(1,128)}', space=vmem, size = 0x12000, scoped, tag = 'internal scratch']
  %s0 = inlined_call_operand.vmem [shape: f32[64,32], index: 0, kind: input, shape index: {}]
  %s1 = inlined_call_operand.vmem [shape: f32[64,32], index: 1, kind: input, shape index: {}]
  %s2 = inlined_call_operand.vmem [shape: f32[64,16], index: 2, kind: input, shape index: {}]
  %s3 = inlined_call_operand.vmem [shape: f32[16,32], index: 3, kind: input, shape index: {}]
  %s4 = inlined_call_operand.vmem [shape: f32[16,32], index: 4, kind: input, shape index: {}]
  %s5 = inlined_call_operand.vmem [shape: f32[64,64], index: 5, kind: input, shape index: {}]
  %s6 = inlined_call_operand.vmem [shape: f32[64,16], index: 6, kind: input, shape index: {}]
  %s7 = inlined_call_operand.vmem [shape: f32[8,64], index: 7, kind: input, shape index: {}]
  %s8 = inlined_call_operand.vmem [shape: f32[64,16], index: 8, kind: output, shape index: {}]
  %s9 = sld [smem:[#allocation0]]
  $region65: #{tpu_custom_call.1} parent=0
    _
  %s11 = ssub.s32 1, %s9
  %s12 = scalar_select 0, %s11, %s9
  loop: start=0, step=1, limit=4
  $region2: #{tpu_custom_call.1} parent=0 // loop_pre_header
    _
  $region3: #{tpu_custom_call.1} parent=0 // loop_header
    %s14 = sphi 0, %s18
    %p15 = scmp.ge.s32.totalorder %s14, 4
    %s24 = sphi 0, %s26
    %s27 = sphi 0, %s24
    %s28 = sphi 0, %s27
    %s44 = sphi 0, %s28
    %s50 = sphi 0, %s52
    %s53 = sphi 0, %s50
    %s54 = sphi 0, %s53
    %s70 = sphi 0, %s54
    %s74 = sphi 0, %s74
    %s76 = sphi 0, %s74
    %s77 = sphi 0, %s76
    %s91 = sphi 0, %s77
    %s95 = sphi 0, %s95
    %s97 = sphi 0, %s95
    %s98 = sphi 0, %s97
    %s112 = sphi 0, %s98
    %s116 = sphi 0, %s116
    %s118 = sphi 0, %s116
    %s119 = sphi 0, %s118
    %s133 = sphi 0, %s119
    %s137 = sphi 0, %s137
    %s139 = sphi 0, %s137
    %s140 = sphi 0, %s139
    %s154 = sphi 0, %s140
    %s158 = sphi 0, %s158
    %s160 = sphi 0, %s158
    %s161 = sphi 0, %s160
    %s175 = sphi 0, %s161
    %s179 = sphi 0, %s179
    %s181 = sphi 0, %s179
    %s182 = sphi 0, %s181
    %s196 = sphi 0, %s182
    %s202 = sphi 0, %s204
    %s205 = sphi 0, %s202
    %s206 = sphi 0, %s205
    %s222 = sphi 0, %s206
  $region4: #{tpu_custom_call.1} parent=0 // loop_header_branch
    %17 = sbr.rel (%p15) target = $region8
  $region5: #{tpu_custom_call.1} parent=0 // loop_body
    %s19 = ssub.s32 %s14, 1
    %s20 = ssub.s32 %s14, 2
    %s21 = sadd.s32 %s14, 1
    %s22 = ssub.s32 %s14, %s21
    %p23 = scmp.eq.s32.totalorder %s22, 0
    %s25 = sadd.s32 %s24, 1
    %s26 = scalar_select %p23, %s24, %s25
    %p29 = pneg %p23
    %p30 = scmp.eq.s32.totalorder %s14, 1
    %p31 = por %p29, %p30
    %p32 = scmp.ne.s32.totalorder %s24, %s27
    %p33 = scmp.eq.s32.totalorder %s14, 0
    %p34 = por %p32, %p33
    %p35 = scmp.ne.s32.totalorder %s24, %s27
    %p36 = scmp.eq.s32.totalorder %s19, 1
    %p37 = por %p35, %p36
    %p38 = scmp.ne.s32.totalorder %s27, %s28
    %p39 = scmp.eq.s32.totalorder %s19, 0
    %p40 = por %p38, %p39
    %p41 = scmp.ne.s32.totalorder %s27, %s28
    %p42 = scmp.eq.s32.totalorder %s20, 1
    %p43 = por %p41, %p42
    %p45 = scmp.ne.s32.totalorder %s28, %s44
    %p46 = scmp.eq.s32.totalorder %s20, 0
    %p47 = por %p45, %p46
    %s48 = ssub.s32 %s14, %s21
    %p49 = scmp.eq.s32.totalorder %s48, 0
    %s51 = sadd.s32 %s50, 1
    %s52 = scalar_select %p49, %s50, %s51
    %p55 = pneg %p49
    %p56 = scmp.eq.s32.totalorder %s14, 1
    %p57 = por %p55, %p56
    %p58 = scmp.ne.s32.totalorder %s50, %s53
    %p59 = scmp.eq.s32.totalorder %s14, 0
    %p60 = por %p58, %p59
    %p61 = scmp.ne.s32.totalorder %s50, %s53
    %p62 = scmp.eq.s32.totalorder %s19, 1
    %p63 = por %p61, %p62
    %p64 = scmp.ne.s32.totalorder %s53, %s54
    %p65 = scmp.eq.s32.totalorder %s19, 0
    %p66 = por %p64, %p65
    %p67 = scmp.ne.s32.totalorder %s53, %s54
    %p68 = scmp.eq.s32.totalorder %s20, 1
    %p69 = por %p67, %p68
    %p71 = scmp.ne.s32.totalorder %s54, %s70
    %p72 = scmp.eq.s32.totalorder %s20, 0
    %p73 = por %p71, %p72
    %s75 = sadd.s32 %s74, 1
    %p78 = scmp.eq.s32.totalorder %s14, 1
    %p79 = scmp.ne.s32.totalorder %s74, %s76
    %p80 = scmp.eq.s32.totalorder %s14, 0
    %p81 = por %p79, %p80
    %p82 = scmp.ne.s32.totalorder %s74, %s76
    %p83 = scmp.eq.s32.totalorder %s19, 1
    %p84 = por %p82, %p83
    %p85 = scmp.ne.s32.totalorder %s76, %s77
    %p86 = scmp.eq.s32.totalorder %s19, 0
    %p87 = por %p85, %p86
    %p88 = scmp.ne.s32.totalorder %s76, %s77
    %p89 = scmp.eq.s32.totalorder %s20, 1
    %p90 = por %p88, %p89
    %p92 = scmp.ne.s32.totalorder %s77, %s91
    %p93 = scmp.eq.s32.totalorder %s20, 0
    %p94 = por %p92, %p93
    %s96 = sadd.s32 %s95, 1
    %p99 = scmp.eq.s32.totalorder %s14, 1
    %p100 = scmp.ne.s32.totalorder %s95, %s97
    %p101 = scmp.eq.s32.totalorder %s14, 0
    %p102 = por %p100, %p101
    %p103 = scmp.ne.s32.totalorder %s95, %s97
    %p104 = scmp.eq.s32.totalorder %s19, 1
    %p105 = por %p103, %p104
    %p106 = scmp.ne.s32.totalorder %s97, %s98
    %p107 = scmp.eq.s32.totalorder %s19, 0
    %p108 = por %p106, %p107
    %p109 = scmp.ne.s32.totalorder %s97, %s98
    %p110 = scmp.eq.s32.totalorder %s20, 1
    %p111 = por %p109, %p110
    %p113 = scmp.ne.s32.totalorder %s98, %s112
    %p114 = scmp.eq.s32.totalorder %s20, 0
    %p115 = por %p113, %p114
    %s117 = sadd.s32 %s116, 1
    %p120 = scmp.eq.s32.totalorder %s14, 1
    %p121 = scmp.ne.s32.totalorder %s116, %s118
    %p122 = scmp.eq.s32.totalorder %s14, 0
    %p123 = por %p121, %p122
    %p124 = scmp.ne.s32.totalorder %s116, %s118
    %p125 = scmp.eq.s32.totalorder %s19, 1
    %p126 = por %p124, %p125
    %p127 = scmp.ne.s32.totalorder %s118, %s119
    %p128 = scmp.eq.s32.totalorder %s19, 0
    %p129 = por %p127, %p128
    %p130 = scmp.ne.s32.totalorder %s118, %s119
    %p131 = scmp.eq.s32.totalorder %s20, 1
    %p132 = por %p130, %p131
    %p134 = scmp.ne.s32.totalorder %s119, %s133
    %p135 = scmp.eq.s32.totalorder %s20, 0
    %p136 = por %p134, %p135
    %s138 = sadd.s32 %s137, 1
    %p141 = scmp.eq.s32.totalorder %s14, 1
    %p142 = scmp.ne.s32.totalorder %s137, %s139
    %p143 = scmp.eq.s32.totalorder %s14, 0
    %p144 = por %p142, %p143
    %p145 = scmp.ne.s32.totalorder %s137, %s139
    %p146 = scmp.eq.s32.totalorder %s19, 1
    %p147 = por %p145, %p146
    %p148 = scmp.ne.s32.totalorder %s139, %s140
    %p149 = scmp.eq.s32.totalorder %s19, 0
    %p150 = por %p148, %p149
    %p151 = scmp.ne.s32.totalorder %s139, %s140
    %p152 = scmp.eq.s32.totalorder %s20, 1
    %p153 = por %p151, %p152
    %p155 = scmp.ne.s32.totalorder %s140, %s154
    %p156 = scmp.eq.s32.totalorder %s20, 0
    %p157 = por %p155, %p156
    %s159 = sadd.s32 %s158, 1
    %p162 = scmp.eq.s32.totalorder %s14, 1
    %p163 = scmp.ne.s32.totalorder %s158, %s160
    %p164 = scmp.eq.s32.totalorder %s14, 0
    %p165 = por %p163, %p164
    %p166 = scmp.ne.s32.totalorder %s158, %s160
    %p167 = scmp.eq.s32.totalorder %s19, 1
    %p168 = por %p166, %p167
    %p169 = scmp.ne.s32.totalorder %s160, %s161
    %p170 = scmp.eq.s32.totalorder %s19, 0
    %p171 = por %p169, %p170
    %p172 = scmp.ne.s32.totalorder %s160, %s161
    %p173 = scmp.eq.s32.totalorder %s20, 1
    %p174 = por %p172, %p173
    %p176 = scmp.ne.s32.totalorder %s161, %s175
    %p177 = scmp.eq.s32.totalorder %s20, 0
    %p178 = por %p176, %p177
    %s180 = sadd.s32 %s179, 1
    %p183 = scmp.eq.s32.totalorder %s14, 1
    %p184 = scmp.ne.s32.totalorder %s179, %s181
    %p185 = scmp.eq.s32.totalorder %s14, 0
    %p186 = por %p184, %p185
    %p187 = scmp.ne.s32.totalorder %s179, %s181
    %p188 = scmp.eq.s32.totalorder %s19, 1
    %p189 = por %p187, %p188
    %p190 = scmp.ne.s32.totalorder %s181, %s182
    %p191 = scmp.eq.s32.totalorder %s19, 0
    %p192 = por %p190, %p191
    %p193 = scmp.ne.s32.totalorder %s181, %s182
    %p194 = scmp.eq.s32.totalorder %s20, 1
    %p195 = por %p193, %p194
    %p197 = scmp.ne.s32.totalorder %s182, %s196
    %p198 = scmp.eq.s32.totalorder %s20, 0
    %p199 = por %p197, %p198
    %s200 = ssub.s32 %s14, %s21
    %p201 = scmp.eq.s32.totalorder %s200, 0
    %s203 = sadd.s32 %s202, 1
    %s204 = scalar_select %p201, %s202, %s203
    %p207 = pneg %p201
    %p208 = scmp.eq.s32.totalorder %s14, 1
    %p209 = por %p207, %p208
    %p210 = scmp.ne.s32.totalorder %s202, %s205
    %p211 = scmp.eq.s32.totalorder %s14, 0
    %p212 = por %p210, %p211
    %p213 = scmp.ne.s32.totalorder %s202, %s205
    %p214 = scmp.eq.s32.totalorder %s19, 1
    %p215 = por %p213, %p214
    %p216 = scmp.ne.s32.totalorder %s205, %s206
    %p217 = scmp.eq.s32.totalorder %s19, 0
    %p218 = por %p216, %p217
    %p219 = scmp.ne.s32.totalorder %s205, %s206
    %p220 = scmp.eq.s32.totalorder %s20, 1
    %p221 = por %p219, %p220
    %p223 = scmp.ne.s32.totalorder %s206, %s222
    %p224 = scmp.eq.s32.totalorder %s20, 0
    %p225 = por %p223, %p224
    %p226 = scmp.le.s32.totalorder 1, %s14
    %p227 = scmp.lt.s32.totalorder %s14, 3
    %p228 = pnand %p226, %p227
    %p229 = pneg %p228
    // Predicated region
    $region9: #{tpu_custom_call.1} parent=5 // pred_check
      _
    $region10: #{tpu_custom_call.1} parent=5 // pred_check_branch
      %231 = sbr.rel (%p228) target = $region12
    $region11: #{tpu_custom_call.1} parent=5 // pred_region
      %s232 = ssub.s32 %s14, 1
      // Predicated region
      $region13: #{tpu_custom_call.1} parent=11 // pred_check
        %p233 = pneg %p87
      $region14: #{tpu_custom_call.1} parent=11 // pred_check_branch
        %235 = sbr.rel (%p233) target = $region16
      $region15: #{tpu_custom_call.1} parent=11 // pred_region
        _
      $region16: #{tpu_custom_call.1} parent=11 // pred_fallthru
        _
      // Predicated region
      $region17: #{tpu_custom_call.1} parent=11 // pred_check
        %p236 = pneg %p108
      $region18: #{tpu_custom_call.1} parent=11 // pred_check_branch
        %238 = sbr.rel (%p236) target = $region20
      $region19: #{tpu_custom_call.1} parent=11 // pred_region
        _
      $region20: #{tpu_custom_call.1} parent=11 // pred_fallthru
        _
      // Predicated region
      $region21: #{tpu_custom_call.1} parent=11 // pred_check
        %p239 = pneg %p129
      $region22: #{tpu_custom_call.1} parent=11 // pred_check_branch
        %241 = sbr.rel (%p239) target = $region24
      $region23: #{tpu_custom_call.1} parent=11 // pred_region
        _
      $region24: #{tpu_custom_call.1} parent=11 // pred_fallthru
        _
      // Predicated region
      $region25: #{tpu_custom_call.1} parent=11 // pred_check
        %p242 = pneg %p150
      $region26: #{tpu_custom_call.1} parent=11 // pred_check_branch
        %244 = sbr.rel (%p242) target = $region28
      $region27: #{tpu_custom_call.1} parent=11 // pred_region
        _
      $region28: #{tpu_custom_call.1} parent=11 // pred_fallthru
        _
      // Predicated region
      $region29: #{tpu_custom_call.1} parent=11 // pred_check
        %p245 = pneg %p171
      $region30: #{tpu_custom_call.1} parent=11 // pred_check_branch
        %247 = sbr.rel (%p245) target = $region32
      $region31: #{tpu_custom_call.1} parent=11 // pred_region
        _
      $region32: #{tpu_custom_call.1} parent=11 // pred_fallthru
        _
      // Predicated region
      $region33: #{tpu_custom_call.1} parent=11 // pred_check
        %p248 = pneg %p192
      $region34: #{tpu_custom_call.1} parent=11 // pred_check_branch
        %250 = sbr.rel (%p248) target = $region36
      $region35: #{tpu_custom_call.1} parent=11 // pred_region
        _
      $region36: #{tpu_custom_call.1} parent=11 // pred_fallthru
        _
    $region12: #{tpu_custom_call.1} parent=5 // pred_fallthru
      _
    %p251 = scmp.lt.s32.totalorder %s14, 2
    // Predicated region
    $region37: #{tpu_custom_call.1} parent=5 // pred_check
      %p252 = pneg %p251
    $region38: #{tpu_custom_call.1} parent=5 // pred_check_branch
      %254 = sbr.rel (%p252) target = $region40
    $region39: #{tpu_custom_call.1} parent=5 // pred_region
      // Predicated region
      $region41: #{tpu_custom_call.1} parent=39 // pred_check
        %p255 = pneg %p34
      $region42: #{tpu_custom_call.1} parent=39 // pred_check_branch
        %257 = sbr.rel (%p255) target = $region44
      $region43: #{tpu_custom_call.1} parent=39 // pred_region
        %s258 = smul.u32 4, %s14
        %p259 = scmp.lt.s32.totalorder %s258, 7
        %s260 = scalar_select %p259, %s258, 7
        %s261 = smul.addr %s260, 8
        %s262 = scalar_lea.vmem %s0, %s261
        %s263 = smul.u32 4, %s14
      $region44: #{tpu_custom_call.1} parent=39 // pred_fallthru
        _
      // Predicated region
      $region45: #{tpu_custom_call.1} parent=39 // pred_check
        %p264 = pneg %p60
      $region46: #{tpu_custom_call.1} parent=39 // pred_check_branch
        %266 = sbr.rel (%p264) target = $region48
      $region47: #{tpu_custom_call.1} parent=39 // pred_region
        %s267 = smul.u32 4, %s14
        %p268 = scmp.lt.s32.totalorder %s267, 7
        %s269 = scalar_select %p268, %s267, 7
        %s270 = smul.addr %s269, 8
        %s271 = scalar_lea.vmem %s1, %s270
        %s272 = smul.u32 4, %s14
      $region48: #{tpu_custom_call.1} parent=39 // pred_fallthru
        _
    $region40: #{tpu_custom_call.1} parent=5 // pred_fallthru
      _
    %p273 = scmp.le.s32.totalorder 1, %s14
    %p274 = scmp.lt.s32.totalorder %s14, 3
    %p275 = pnand %p273, %p274
    %p276 = pneg %p275
    // Predicated region
    $region49: #{tpu_custom_call.1} parent=5 // pred_check
      _
    $region50: #{tpu_custom_call.1} parent=5 // pred_check_branch
      %278 = sbr.rel (%p275) target = $region52
    $region51: #{tpu_custom_call.1} parent=5 // pred_region
      %s279 = ssub.s32 %s14, 1
      %s280 = smul.u32 4, %s19
      %p281 = scmp.lt.s32.totalorder %s280, 7
      %s282 = scalar_select %p281, %s280, 7
      %s283 = smul.addr %s282, 8
      %s284 = scalar_lea.vmem %s0, %s283
      %p285 = pneg %p40
      %p286 = pneg %p37
      %s287 = smul.u32 4, %s19
      %p288 = scmp.lt.s32.totalorder %s287, 7
      %s289 = scalar_select %p288, %s287, 7
      %s290 = smul.addr %s289, 8
      %s291 = scalar_lea.vmem %s1, %s290
      %p292 = pneg %p66
      %p293 = pneg %p63
      %p294 = pneg %p87
      %p295 = pneg %p84
      %p296 = pneg %p108
      %p297 = pneg %p105
      %p298 = pneg %p129
      %p299 = pneg %p126
      %p300 = pneg %p150
      %p301 = pneg %p147
      %p302 = pneg %p171
      %p303 = pneg %p168
      %p304 = pneg %p192
      %p305 = pneg %p189
      %p306 = pneg %p218
      %p307 = pneg %p215
      %s308 = smul.u32 4, %s19
      %p309 = scmp.lt.s32.totalorder %s308, 7
      %s310 = scalar_select %p309, %s308, 7
      %s311 = smul.addr %s310, 8
      %s312 = scalar_lea.vmem %s8, %s311
      %s313 = smul.u32 4, %s19
      %p314 = scmp.lt.s32.totalorder %s313, 7
      %s315 = scalar_select %p314, %s313, 7
      %s316 = smul.addr %s315, 8
      %s317 = scalar_lea.vmem %s0, %s316
      %s318 = smul.u32 4, %s19
      %s319 = smul.u32 4, %s19
      %p320 = scmp.lt.s32.totalorder %s319, 7
      %s321 = scalar_select %p320, %s319, 7
      %s322 = smul.addr %s321, 8
      %s323 = scalar_lea.vmem %s1, %s322
      %s324 = smul.u32 4, %s19
      %s325 = smul.u32 4, %s19
      %p326 = scmp.lt.s32.totalorder %s325, 7
      %s327 = scalar_select %p326, %s325, 7
      %s328 = smul.addr %s327, 8
      %s329 = scalar_lea.vmem %s8, %s328
      %s330 = smul.u32 4, %s19
      %v331 = vld [vmem:[%s317] sm:$0xff]
      %v332 = vld [vmem:[%s317 + $0x8] sm:$0xff]
      %v333 = vld [vmem:[%s317 + $0x10] sm:$0xff]
      %v334 = vld [vmem:[%s317 + $0x18] sm:$0xff]
      %v335 = vld [vmem:[%s323] sm:$0xff]
      %v336 = vld [vmem:[%s323 + $0x8] sm:$0xff]
      %v337 = vld [vmem:[%s323 + $0x10] sm:$0xff]
      %v338 = vld [vmem:[%s323 + $0x18] sm:$0xff]
      %v339 = vld [vmem:[%s2] sm:$0xff]
      %v340 = vld [vmem:[%s2 + $0x8] sm:$0xff]
      %v341 = vld [vmem:[%s2 + $0x10] sm:$0xff]
      %v342 = vld [vmem:[%s2 + $0x18] sm:$0xff]
      %v343 = vld [vmem:[%s2 + $0x20] sm:$0xff]
      %v344 = vld [vmem:[%s2 + $0x28] sm:$0xff]
      %v345 = vld [vmem:[%s2 + $0x30] sm:$0xff]
      %v346 = vld [vmem:[%s2 + $0x38] sm:$0xff]
      %vm347 = vcmask 261120
      %v349 = vsel %vm347, %v335, 0
      %v352 = vsel %vm347, %v336, 0
      %v355 = vsel %vm347, %v337, 0
      %v358 = vsel %vm347, %v338, 0
      %360 = vmatprep.subr.mxu0 0.0
      %361 = vmatpush1.msra.mxu0 0.0
      %362 = vmatprep.subr.mxu0 0.0
      %363 = vmatpush1.msra.mxu0 0.0
      %364 = vmatprep.subr.mxu0 0.0
      %365 = vmatpush1.msra.mxu0 0.0
      %366 = vmatprep.subr.mxu0 0.0
      %367 = vmatpush1.msra.mxu0 0.0
      %368 = vmatprep.subr.mxu0 0.0
      %369 = vmatpush1.msra.mxu0 0.0
      %370 = vmatprep.subr.mxu0 0.0
      %371 = vmatpush1.msra.mxu0 0.0
      %372 = vmatprep.subr.mxu0 0.0
      %373 = vmatpush1.msra.mxu0 0.0
      %374 = vmatprep.subr.mxu0 0.0
      %375 = vmatpush1.msra.mxu0 0.0
      %376 = vmatprep.subr.mxu0 0.0
      %377 = vmatpush1.msra.mxu0 0.0
      %378 = vmatprep.subr.mxu0 0.0
      %379 = vmatpush1.msra.mxu0 0.0
      %380 = vmatprep.subr.mxu0 0.0
      %381 = vmatpush1.msra.mxu0 0.0
      %382 = vmatprep.subr.mxu0 0.0
      %383 = vmatpush1.msra.mxu0 0.0
      %384 = vmatprep.subr.mxu0 0.0
      %385 = vmatpush1.msra.mxu0 %v346
      %386 = vmatprep.subr.mxu0 0.0
      %387 = vmatpush1.msra.mxu0 %v345
      %388 = vmatprep.subr.mxu0 0.0
      %389 = vmatpush1.msra.mxu0 %v344
      %390 = vmatprep.subr.mxu0 0.0
      %391 = vmatpush1.msra.mxu0 %v343
      %392 = vmatprep.subr.mxu0 0.0
      %393 = vmatpush2.msra.mxu0 0.0
      %394 = vmatprep.subr.mxu0 0.0
      %395 = vmatpush2.msra.mxu0 0.0
      %396 = vmatprep.subr.mxu0 0.0
      %397 = vmatpush2.msra.mxu0 0.0
      %398 = vmatprep.subr.mxu0 0.0
      %399 = vmatpush2.msra.mxu0 0.0
      %400 = vmatprep.subr.mxu0 0.0
      %401 = vmatpush2.msra.mxu0 0.0
      %402 = vmatprep.subr.mxu0 0.0
      %403 = vmatpush2.msra.mxu0 0.0
      %404 = vmatprep.subr.mxu0 0.0
      %405 = vmatpush2.msra.mxu0 0.0
      %406 = vmatprep.subr.mxu0 0.0
      %407 = vmatpush2.msra.mxu0 0.0
      %408 = vmatprep.subr.mxu0 0.0
      %409 = vmatpush2.msra.mxu0 0.0
      %410 = vmatprep.subr.mxu0 0.0
      %411 = vmatpush2.msra.mxu0 0.0
      %412 = vmatprep.subr.mxu0 0.0
      %413 = vmatpush2.msra.mxu0 0.0
      %414 = vmatprep.subr.mxu0 0.0
      %415 = vmatpush2.msra.mxu0 0.0
      %416 = vmatprep.subr.mxu0 0.0
      %417 = vmatpush2.msra.mxu0 0.0
      %418 = vmatprep.subr.mxu0 0.0
      %419 = vmatpush2.msra.mxu0 0.0
      %420 = vmatprep.subr.mxu0 0.0
      %421 = vmatpush2.msra.mxu0 0.0
      %422 = vmatprep.subr.mxu0 0.0
      %423 = vmatpush2.msra.mxu0 0.0
      %424 = vmatprep.mubr.f32.mxu0 0.0
      %425 = vmatmul.mubr.f32.gmra.mxu0 %v349
      %v426 = vpop.f32.mrf.mxu0
      %v427 = vadd.f32 0.0, %v426
      %v428 = vpop.f32.mrf.mxu0
      %429 = vmatprep.mubr.f32.mxu0 0.0
      %430 = vmatmul.mubr.f32.gmra.mxu0 %v352
      %v431 = vpop.f32.mrf.mxu0
      %v432 = vadd.f32 0.0, %v431
      %v433 = vpop.f32.mrf.mxu0
      %434 = vmatprep.mubr.f32.mxu0 0.0
      %435 = vmatmul.mubr.f32.gmra.mxu0 %v355
      %v436 = vpop.f32.mrf.mxu0
      %v437 = vadd.f32 0.0, %v436
      %v438 = vpop.f32.mrf.mxu0
      %439 = vmatprep.mubr.f32.mxu0 0.0
      %440 = vmatmul.mubr.f32.gmra.mxu0 %v358
      %v441 = vpop.f32.mrf.mxu0
      %v442 = vadd.f32 0.0, %v441
      %v443 = vpop.f32.mrf.mxu0
      %444 = vdwg.mxu0
      %v446 = vsel %vm347, %v331, 0
      %v449 = vsel %vm347, %v332, 0
      %v452 = vsel %vm347, %v333, 0
      %v455 = vsel %vm347, %v334, 0
      %457 = vmatprep.subr.mxu0 0.0
      %458 = vmatpush1.msra.mxu0 0.0
      %459 = vmatprep.subr.mxu0 0.0
      %460 = vmatpush1.msra.mxu0 0.0
      %461 = vmatprep.subr.mxu0 0.0
      %462 = vmatpush1.msra.mxu0 0.0
      %463 = vmatprep.subr.mxu0 0.0
      %464 = vmatpush1.msra.mxu0 0.0
      %465 = vmatprep.subr.mxu0 0.0
      %466 = vmatpush1.msra.mxu0 0.0
      %467 = vmatprep.subr.mxu0 0.0
      %468 = vmatpush1.msra.mxu0 0.0
      %469 = vmatprep.subr.mxu0 0.0
      %470 = vmatpush1.msra.mxu0 0.0
      %471 = vmatprep.subr.mxu0 0.0
      %472 = vmatpush1.msra.mxu0 0.0
      %473 = vmatprep.subr.mxu0 0.0
      %474 = vmatpush1.msra.mxu0 0.0
      %475 = vmatprep.subr.mxu0 0.0
      %476 = vmatpush1.msra.mxu0 0.0
      %477 = vmatprep.subr.mxu0 0.0
      %478 = vmatpush1.msra.mxu0 0.0
      %479 = vmatprep.subr.mxu0 0.0
      %480 = vmatpush1.msra.mxu0 0.0
      %481 = vmatprep.subr.mxu0 0.0
      %482 = vmatpush1.msra.mxu0 %v342
      %483 = vmatprep.subr.mxu0 0.0
      %484 = vmatpush1.msra.mxu0 %v341
      %485 = vmatprep.subr.mxu0 0.0
      %486 = vmatpush1.msra.mxu0 %v340
      %487 = vmatprep.subr.mxu0 0.0
      %488 = vmatpush1.msra.mxu0 %v339
      %489 = vmatprep.subr.mxu0 0.0
      %490 = vmatpush2.msra.mxu0 0.0
      %491 = vmatprep.subr.mxu0 0.0
      %492 = vmatpush2.msra.mxu0 0.0
      %493 = vmatprep.subr.mxu0 0.0
      %494 = vmatpush2.msra.mxu0 0.0
      %495 = vmatprep.subr.mxu0 0.0
      %496 = vmatpush2.msra.mxu0 0.0
      %497 = vmatprep.subr.mxu0 0.0
      %498 = vmatpush2.msra.mxu0 0.0
      %499 = vmatprep.subr.mxu0 0.0
      %500 = vmatpush2.msra.mxu0 0.0
      %501 = vmatprep.subr.mxu0 0.0
      %502 = vmatpush2.msra.mxu0 0.0
      %503 = vmatprep.subr.mxu0 0.0
      %504 = vmatpush2.msra.mxu0 0.0
      %505 = vmatprep.subr.mxu0 0.0
      %506 = vmatpush2.msra.mxu0 0.0
      %507 = vmatprep.subr.mxu0 0.0
      %508 = vmatpush2.msra.mxu0 0.0
      %509 = vmatprep.subr.mxu0 0.0
      %510 = vmatpush2.msra.mxu0 0.0
      %511 = vmatprep.subr.mxu0 0.0
      %512 = vmatpush2.msra.mxu0 0.0
      %513 = vmatprep.subr.mxu0 0.0
      %514 = vmatpush2.msra.mxu0 0.0
      %515 = vmatprep.subr.mxu0 0.0
      %516 = vmatpush2.msra.mxu0 0.0
      %517 = vmatprep.subr.mxu0 0.0
      %518 = vmatpush2.msra.mxu0 0.0
      %519 = vmatprep.subr.mxu0 0.0
      %520 = vmatpush2.msra.mxu0 0.0
      %521 = vmatprep.mubr.f32.mxu0 0.0
      %522 = vmatmul.mubr.f32.gmra.mxu0 %v446
      %v523 = vpop.f32.mrf.mxu0
      %v524 = vadd.f32 %v427, %v523
      %v525 = vpop.f32.mrf.mxu0
      %526 = vmatprep.mubr.f32.mxu0 0.0
      %527 = vmatmul.mubr.f32.gmra.mxu0 %v449
      %v528 = vpop.f32.mrf.mxu0
      %v529 = vadd.f32 %v432, %v528
      %v530 = vpop.f32.mrf.mxu0
      %531 = vmatprep.mubr.f32.mxu0 0.0
      %532 = vmatmul.mubr.f32.gmra.mxu0 %v452
      %v533 = vpop.f32.mrf.mxu0
      %v534 = vadd.f32 %v437, %v533
      %v535 = vpop.f32.mrf.mxu0
      %536 = vmatprep.mubr.f32.mxu0 0.0
      %537 = vmatmul.mubr.f32.gmra.mxu0 %v455
      %v538 = vpop.f32.mrf.mxu0
      %v539 = vadd.f32 %v442, %v538
      %v540 = vpop.f32.mrf.mxu0
      %541 = vdwg.mxu0
      %v542 = vld [vmem:[%s7] sm:$0x1]
      %v543 = vlaneseq
      %v544 = vshrl.u32 %v543, 7
      %v545 = vsub.s32 0, %v544
      %v546 = vrot.slane %v542, %v545
      %v547 = vadd.f32 %v524, %v546
      %v548 = vadd.f32 %v529, %v546
      %v549 = vadd.f32 %v534, %v546
      %v550 = vadd.f32 %v539, %v546
      %v551 = vmax.f32 %v547, 0.0
      %v552 = vmax.f32 %v548, 0.0
      %v553 = vmax.f32 %v549, 0.0
      %v554 = vmax.f32 %v550, 0.0
      %v555 = vld [vmem:[%s3] sm:$0xff]
      %v556 = vld [vmem:[%s3 + $0x8] sm:$0xff]
      %v557 = vld [vmem:[%s7 + $0x1] sm:$0x1]
      %v558 = vlaneseq
      %v559 = vshrl.u32 %v558, 7
      %v560 = vsub.s32 0, %v559
      %v561 = vrot.slane %v557, %v560
      %vm562 = vcmask 130048
      %v564 = vsel %vm562, %v551, 0
      %v567 = vsel %vm562, %v552, 0
      %v570 = vsel %vm562, %v553, 0
      %v573 = vsel %vm562, %v554, 0
      %575 = vmatprep.subr.mxu0 0.0
      %576 = vmatpush1.msra.mxu0 0.0
      %577 = vmatprep.subr.mxu0 0.0
      %578 = vmatpush1.msra.mxu0 0.0
      %579 = vmatprep.subr.mxu0 0.0
      %580 = vmatpush1.msra.mxu0 0.0
      %581 = vmatprep.subr.mxu0 0.0
      %582 = vmatpush1.msra.mxu0 0.0
      %583 = vmatprep.subr.mxu0 0.0
      %584 = vmatpush1.msra.mxu0 0.0
      %585 = vmatprep.subr.mxu0 0.0
      %586 = vmatpush1.msra.mxu0 0.0
      %587 = vmatprep.subr.mxu0 0.0
      %588 = vmatpush1.msra.mxu0 0.0
      %589 = vmatprep.subr.mxu0 0.0
      %590 = vmatpush1.msra.mxu0 0.0
      %591 = vmatprep.subr.mxu0 0.0
      %592 = vmatpush1.msra.mxu0 0.0
      %593 = vmatprep.subr.mxu0 0.0
      %594 = vmatpush1.msra.mxu0 0.0
      %595 = vmatprep.subr.mxu0 0.0
      %596 = vmatpush1.msra.mxu0 0.0
      %597 = vmatprep.subr.mxu0 0.0
      %598 = vmatpush1.msra.mxu0 0.0
      %599 = vmatprep.subr.mxu0 0.0
      %600 = vmatpush1.msra.mxu0 0.0
      %601 = vmatprep.subr.mxu0 0.0
      %602 = vmatpush1.msra.mxu0 0.0
      %603 = vmatprep.subr.mxu0 0.0
      %604 = vmatpush1.msra.mxu0 %v556
      %605 = vmatprep.subr.mxu0 0.0
      %606 = vmatpush1.msra.mxu0 %v555
      %607 = vmatprep.subr.mxu0 0.0
      %608 = vmatpush2.msra.mxu0 0.0
      %609 = vmatprep.subr.mxu0 0.0
      %610 = vmatpush2.msra.mxu0 0.0
      %611 = vmatprep.subr.mxu0 0.0
      %612 = vmatpush2.msra.mxu0 0.0
      %613 = vmatprep.subr.mxu0 0.0
      %614 = vmatpush2.msra.mxu0 0.0
      %615 = vmatprep.subr.mxu0 0.0
      %616 = vmatpush2.msra.mxu0 0.0
      %617 = vmatprep.subr.mxu0 0.0
      %618 = vmatpush2.msra.mxu0 0.0
      %619 = vmatprep.subr.mxu0 0.0
      %620 = vmatpush2.msra.mxu0 0.0
      %621 = vmatprep.subr.mxu0 0.0
      %622 = vmatpush2.msra.mxu0 0.0
      %623 = vmatprep.subr.mxu0 0.0
      %624 = vmatpush2.msra.mxu0 0.0
      %625 = vmatprep.subr.mxu0 0.0
      %626 = vmatpush2.msra.mxu0 0.0
      %627 = vmatprep.subr.mxu0 0.0
      %628 = vmatpush2.msra.mxu0 0.0
      %629 = vmatprep.subr.mxu0 0.0
      %630 = vmatpush2.msra.mxu0 0.0
      %631 = vmatprep.subr.mxu0 0.0
      %632 = vmatpush2.msra.mxu0 0.0
      %633 = vmatprep.subr.mxu0 0.0
      %634 = vmatpush2.msra.mxu0 0.0
      %635 = vmatprep.subr.mxu0 0.0
      %636 = vmatpush2.msra.mxu0 0.0
      %637 = vmatprep.subr.mxu0 0.0
      %638 = vmatpush2.msra.mxu0 0.0
      %639 = vmatprep.mubr.f32.mxu0 0.0
      %640 = vmatmul.mubr.f32.gmra.mxu0 %v564
      %v641 = vpop.f32.mrf.mxu0
      %v642 = vadd.f32 %v561, %v641
      %v643 = vpop.f32.mrf.mxu0
      %644 = vmatprep.mubr.f32.mxu0 0.0
      %645 = vmatmul.mubr.f32.gmra.mxu0 %v567
      %v646 = vpop.f32.mrf.mxu0
      %v647 = vadd.f32 %v561, %v646
      %v648 = vpop.f32.mrf.mxu0
      %649 = vmatprep.mubr.f32.mxu0 0.0
      %650 = vmatmul.mubr.f32.gmra.mxu0 %v570
      %v651 = vpop.f32.mrf.mxu0
      %v652 = vadd.f32 %v561, %v651
      %v653 = vpop.f32.mrf.mxu0
      %654 = vmatprep.mubr.f32.mxu0 0.0
      %655 = vmatmul.mubr.f32.gmra.mxu0 %v573
      %v656 = vpop.f32.mrf.mxu0
      %v657 = vadd.f32 %v561, %v656
      %v658 = vpop.f32.mrf.mxu0
      %659 = vdwg.mxu0
      %v660 = vxor.u32 %v642, 2147483648
      %v661 = vxor.u32 %v647, 2147483648
      %v662 = vxor.u32 %v652, 2147483648
      %v663 = vxor.u32 %v657, 2147483648
      %v664 = vmul.f32 %v660, 1.442695
      %v665 = vpow.pop %v664
      %v666 = vmul.f32 %v661, 1.442695
      %v667 = vpow.pop %v666
      %v668 = vmul.f32 %v662, 1.442695
      %v669 = vpow.pop %v668
      %v670 = vmul.f32 %v663, 1.442695
      %v671 = vpow.pop %v670
      %v672 = vadd.f32 %v665, 1.0
      %v673 = vadd.f32 %v667, 1.0
      %v674 = vadd.f32 %v669, 1.0
      %v675 = vadd.f32 %v671, 1.0
      %v676 = vrcp.pop %v672
      %v677 = vmul.f32 1.0, %v676
      %v678 = vrcp.pop %v673
      %v679 = vmul.f32 1.0, %v678
      %v680 = vrcp.pop %v674
      %v681 = vmul.f32 1.0, %v680
      %v682 = vrcp.pop %v675
      %v683 = vmul.f32 1.0, %v682
      %v684 = vld [vmem:[%s4] sm:$0xff]
      %v685 = vld [vmem:[%s4 + $0x8] sm:$0xff]
      %v686 = vld [vmem:[%s7 + $0x2] sm:$0x1]
      %v687 = vlaneseq
      %v688 = vshrl.u32 %v687, 7
      %v689 = vsub.s32 0, %v688
      %v690 = vrot.slane %v686, %v689
      %691 = vmatprep.subr.mxu0 0.0
      %692 = vmatpush1.msra.mxu0 0.0
      %693 = vmatprep.subr.mxu0 0.0
      %694 = vmatpush1.msra.mxu0 0.0
      %695 = vmatprep.subr.mxu0 0.0
      %696 = vmatpush1.msra.mxu0 0.0
      %697 = vmatprep.subr.mxu0 0.0
      %698 = vmatpush1.msra.mxu0 0.0
      %699 = vmatprep.subr.mxu0 0.0
      %700 = vmatpush1.msra.mxu0 0.0
      %701 = vmatprep.subr.mxu0 0.0
      %702 = vmatpush1.msra.mxu0 0.0
      %703 = vmatprep.subr.mxu0 0.0
      %704 = vmatpush1.msra.mxu0 0.0
      %705 = vmatprep.subr.mxu0 0.0
      %706 = vmatpush1.msra.mxu0 0.0
      %707 = vmatprep.subr.mxu0 0.0
      %708 = vmatpush1.msra.mxu0 0.0
      %709 = vmatprep.subr.mxu0 0.0
      %710 = vmatpush1.msra.mxu0 0.0
      %711 = vmatprep.subr.mxu0 0.0
      %712 = vmatpush1.msra.mxu0 0.0
      %713 = vmatprep.subr.mxu0 0.0
      %714 = vmatpush1.msra.mxu0 0.0
      %715 = vmatprep.subr.mxu0 0.0
      %716 = vmatpush1.msra.mxu0 0.0
      %717 = vmatprep.subr.mxu0 0.0
      %718 = vmatpush1.msra.mxu0 0.0
      %719 = vmatprep.subr.mxu0 0.0
      %720 = vmatpush1.msra.mxu0 %v685
      %721 = vmatprep.subr.mxu0 0.0
      %722 = vmatpush1.msra.mxu0 %v684
      %723 = vmatprep.subr.mxu0 0.0
      %724 = vmatpush2.msra.mxu0 0.0
      %725 = vmatprep.subr.mxu0 0.0
      %726 = vmatpush2.msra.mxu0 0.0
      %727 = vmatprep.subr.mxu0 0.0
      %728 = vmatpush2.msra.mxu0 0.0
      %729 = vmatprep.subr.mxu0 0.0
      %730 = vmatpush2.msra.mxu0 0.0
      %731 = vmatprep.subr.mxu0 0.0
      %732 = vmatpush2.msra.mxu0 0.0
      %733 = vmatprep.subr.mxu0 0.0
      %734 = vmatpush2.msra.mxu0 0.0
      %735 = vmatprep.subr.mxu0 0.0
      %736 = vmatpush2.msra.mxu0 0.0
      %737 = vmatprep.subr.mxu0 0.0
      %738 = vmatpush2.msra.mxu0 0.0
      %739 = vmatprep.subr.mxu0 0.0
      %740 = vmatpush2.msra.mxu0 0.0
      %741 = vmatprep.subr.mxu0 0.0
      %742 = vmatpush2.msra.mxu0 0.0
      %743 = vmatprep.subr.mxu0 0.0
      %744 = vmatpush2.msra.mxu0 0.0
      %745 = vmatprep.subr.mxu0 0.0
      %746 = vmatpush2.msra.mxu0 0.0
      %747 = vmatprep.subr.mxu0 0.0
      %748 = vmatpush2.msra.mxu0 0.0
      %749 = vmatprep.subr.mxu0 0.0
      %750 = vmatpush2.msra.mxu0 0.0
      %751 = vmatprep.subr.mxu0 0.0
      %752 = vmatpush2.msra.mxu0 0.0
      %753 = vmatprep.subr.mxu0 0.0
      %754 = vmatpush2.msra.mxu0 0.0
      %755 = vmatprep.mubr.f32.mxu0 0.0
      %756 = vmatmul.mubr.f32.gmra.mxu0 %v564
      %v757 = vpop.f32.mrf.mxu0
      %v758 = vadd.f32 %v690, %v757
      %v759 = vpop.f32.mrf.mxu0
      %760 = vmatprep.mubr.f32.mxu0 0.0
      %761 = vmatmul.mubr.f32.gmra.mxu0 %v567
      %v762 = vpop.f32.mrf.mxu0
      %v763 = vadd.f32 %v690, %v762
      %v764 = vpop.f32.mrf.mxu0
      %765 = vmatprep.mubr.f32.mxu0 0.0
      %766 = vmatmul.mubr.f32.gmra.mxu0 %v570
      %v767 = vpop.f32.mrf.mxu0
      %v768 = vadd.f32 %v690, %v767
      %v769 = vpop.f32.mrf.mxu0
      %770 = vmatprep.mubr.f32.mxu0 0.0
      %771 = vmatmul.mubr.f32.gmra.mxu0 %v573
      %v772 = vpop.f32.mrf.mxu0
      %v773 = vadd.f32 %v690, %v772
      %v774 = vpop.f32.mrf.mxu0
      %775 = vdwg.mxu0
      %v776 = vxor.u32 %v758, 2147483648
      %v777 = vxor.u32 %v763, 2147483648
      %v778 = vxor.u32 %v768, 2147483648
      %v779 = vxor.u32 %v773, 2147483648
      %v780 = vmul.f32 %v776, 1.442695
      %v781 = vpow.pop %v780
      %v782 = vmul.f32 %v777, 1.442695
      %v783 = vpow.pop %v782
      %v784 = vmul.f32 %v778, 1.442695
      %v785 = vpow.pop %v784
      %v786 = vmul.f32 %v779, 1.442695
      %v787 = vpow.pop %v786
      %v788 = vadd.f32 %v781, 1.0
      %v789 = vadd.f32 %v783, 1.0
      %v790 = vadd.f32 %v785, 1.0
      %v791 = vadd.f32 %v787, 1.0
      %v792 = vrcp.pop %v788
      %v793 = vmul.f32 1.0, %v792
      %v794 = vrcp.pop %v789
      %v795 = vmul.f32 1.0, %v794
      %v796 = vrcp.pop %v790
      %v797 = vmul.f32 1.0, %v796
      %v798 = vrcp.pop %v791
      %v799 = vmul.f32 1.0, %v798
      %v800 = vmul.f32 %v677, %v331
      %v801 = vmul.f32 %v679, %v332
      %v802 = vmul.f32 %v681, %v333
      %v803 = vmul.f32 %v683, %v334
      %v804 = vadd.f32 %v800, %v331
      %v805 = vadd.f32 %v801, %v332
      %v806 = vadd.f32 %v802, %v333
      %v807 = vadd.f32 %v803, %v334
      %v808 = vmul.f32 %v793, %v335
      %v809 = vmul.f32 %v795, %v336
      %v810 = vmul.f32 %v797, %v337
      %v811 = vmul.f32 %v799, %v338
      %v812 = vadd.f32 %v808, %v335
      %v813 = vadd.f32 %v809, %v336
      %v814 = vadd.f32 %v810, %v337
      %v815 = vadd.f32 %v811, %v338
      %v816 = vld [vmem:[%s5] sm:$0xff]
      %v817 = vld [vmem:[%s5 + $0x8] sm:$0xff]
      %v818 = vld [vmem:[%s5 + $0x10] sm:$0xff]
      %v819 = vld [vmem:[%s5 + $0x18] sm:$0xff]
      %v820 = vld [vmem:[%s5 + $0x20] sm:$0xff]
      %v821 = vld [vmem:[%s5 + $0x28] sm:$0xff]
      %v822 = vld [vmem:[%s5 + $0x30] sm:$0xff]
      %v823 = vld [vmem:[%s5 + $0x38] sm:$0xff]
      %v825 = vsel %vm347, %v812, 0
      %v828 = vsel %vm347, %v813, 0
      %v831 = vsel %vm347, %v814, 0
      %v834 = vsel %vm347, %v815, 0
      %836 = vmatprep.subr.mxu0 0.0
      %837 = vmatpush1.msra.mxu0 0.0
      %838 = vmatprep.subr.mxu0 0.0
      %839 = vmatpush1.msra.mxu0 0.0
      %840 = vmatprep.subr.mxu0 0.0
      %841 = vmatpush1.msra.mxu0 0.0
      %842 = vmatprep.subr.mxu0 0.0
      %843 = vmatpush1.msra.mxu0 0.0
      %844 = vmatprep.subr.mxu0 0.0
      %845 = vmatpush1.msra.mxu0 0.0
      %846 = vmatprep.subr.mxu0 0.0
      %847 = vmatpush1.msra.mxu0 0.0
      %848 = vmatprep.subr.mxu0 0.0
      %849 = vmatpush1.msra.mxu0 0.0
      %850 = vmatprep.subr.mxu0 0.0
      %851 = vmatpush1.msra.mxu0 0.0
      %852 = vmatprep.subr.mxu0 0.0
      %853 = vmatpush1.msra.mxu0 0.0
      %854 = vmatprep.subr.mxu0 0.0
      %855 = vmatpush1.msra.mxu0 0.0
      %856 = vmatprep.subr.mxu0 0.0
      %857 = vmatpush1.msra.mxu0 0.0
      %858 = vmatprep.subr.mxu0 0.0
      %859 = vmatpush1.msra.mxu0 0.0
      %860 = vmatprep.subr.mxu0 0.0
      %861 = vmatpush1.msra.mxu0 %v823
      %862 = vmatprep.subr.mxu0 0.0
      %863 = vmatpush1.msra.mxu0 %v822
      %864 = vmatprep.subr.mxu0 0.0
      %865 = vmatpush1.msra.mxu0 %v821
      %866 = vmatprep.subr.mxu0 0.0
      %867 = vmatpush1.msra.mxu0 %v820
      %868 = vmatprep.subr.mxu0 0.0
      %869 = vmatpush2.msra.mxu0 0.0
      %870 = vmatprep.subr.mxu0 0.0
      %871 = vmatpush2.msra.mxu0 0.0
      %872 = vmatprep.subr.mxu0 0.0
      %873 = vmatpush2.msra.mxu0 0.0
      %874 = vmatprep.subr.mxu0 0.0
      %875 = vmatpush2.msra.mxu0 0.0
      %876 = vmatprep.subr.mxu0 0.0
      %877 = vmatpush2.msra.mxu0 0.0
      %878 = vmatprep.subr.mxu0 0.0
      %879 = vmatpush2.msra.mxu0 0.0
      %880 = vmatprep.subr.mxu0 0.0
      %881 = vmatpush2.msra.mxu0 0.0
      %882 = vmatprep.subr.mxu0 0.0
      %883 = vmatpush2.msra.mxu0 0.0
      %884 = vmatprep.subr.mxu0 0.0
      %885 = vmatpush2.msra.mxu0 0.0
      %886 = vmatprep.subr.mxu0 0.0
      %887 = vmatpush2.msra.mxu0 0.0
      %888 = vmatprep.subr.mxu0 0.0
      %889 = vmatpush2.msra.mxu0 0.0
      %890 = vmatprep.subr.mxu0 0.0
      %891 = vmatpush2.msra.mxu0 0.0
      %892 = vmatprep.subr.mxu0 0.0
      %893 = vmatpush2.msra.mxu0 0.0
      %894 = vmatprep.subr.mxu0 0.0
      %895 = vmatpush2.msra.mxu0 0.0
      %896 = vmatprep.subr.mxu0 0.0
      %897 = vmatpush2.msra.mxu0 0.0
      %898 = vmatprep.subr.mxu0 0.0
      %899 = vmatpush2.msra.mxu0 0.0
      %900 = vmatprep.mubr.f32.mxu0 0.0
      %901 = vmatmul.mubr.f32.gmra.mxu0 %v825
      %v902 = vpop.f32.mrf.mxu0
      %v903 = vadd.f32 0.0, %v902
      %v904 = vpop.f32.mrf.mxu0
      %905 = vmatprep.mubr.f32.mxu0 0.0
      %906 = vmatmul.mubr.f32.gmra.mxu0 %v828
      %v907 = vpop.f32.mrf.mxu0
      %v908 = vadd.f32 0.0, %v907
      %v909 = vpop.f32.mrf.mxu0
      %910 = vmatprep.mubr.f32.mxu0 0.0
      %911 = vmatmul.mubr.f32.gmra.mxu0 %v831
      %v912 = vpop.f32.mrf.mxu0
      %v913 = vadd.f32 0.0, %v912
      %v914 = vpop.f32.mrf.mxu0
      %915 = vmatprep.mubr.f32.mxu0 0.0
      %916 = vmatmul.mubr.f32.gmra.mxu0 %v834
      %v917 = vpop.f32.mrf.mxu0
      %v918 = vadd.f32 0.0, %v917
      %v919 = vpop.f32.mrf.mxu0
      %920 = vdwg.mxu0
      %v922 = vsel %vm347, %v804, 0
      %v925 = vsel %vm347, %v805, 0
      %v928 = vsel %vm347, %v806, 0
      %v931 = vsel %vm347, %v807, 0
      %933 = vmatprep.subr.mxu0 0.0
      %934 = vmatpush1.msra.mxu0 0.0
      %935 = vmatprep.subr.mxu0 0.0
      %936 = vmatpush1.msra.mxu0 0.0
      %937 = vmatprep.subr.mxu0 0.0
      %938 = vmatpush1.msra.mxu0 0.0
      %939 = vmatprep.subr.mxu0 0.0
      %940 = vmatpush1.msra.mxu0 0.0
      %941 = vmatprep.subr.mxu0 0.0
      %942 = vmatpush1.msra.mxu0 0.0
      %943 = vmatprep.subr.mxu0 0.0
      %944 = vmatpush1.msra.mxu0 0.0
      %945 = vmatprep.subr.mxu0 0.0
      %946 = vmatpush1.msra.mxu0 0.0
      %947 = vmatprep.subr.mxu0 0.0
      %948 = vmatpush1.msra.mxu0 0.0
      %949 = vmatprep.subr.mxu0 0.0
      %950 = vmatpush1.msra.mxu0 0.0
      %951 = vmatprep.subr.mxu0 0.0
      %952 = vmatpush1.msra.mxu0 0.0
      %953 = vmatprep.subr.mxu0 0.0
      %954 = vmatpush1.msra.mxu0 0.0
      %955 = vmatprep.subr.mxu0 0.0
      %956 = vmatpush1.msra.mxu0 0.0
      %957 = vmatprep.subr.mxu0 0.0
      %958 = vmatpush1.msra.mxu0 %v819
      %959 = vmatprep.subr.mxu0 0.0
      %960 = vmatpush1.msra.mxu0 %v818
      %961 = vmatprep.subr.mxu0 0.0
      %962 = vmatpush1.msra.mxu0 %v817
      %963 = vmatprep.subr.mxu0 0.0
      %964 = vmatpush1.msra.mxu0 %v816
      %965 = vmatprep.subr.mxu0 0.0
      %966 = vmatpush2.msra.mxu0 0.0
      %967 = vmatprep.subr.mxu0 0.0
      %968 = vmatpush2.msra.mxu0 0.0
      %969 = vmatprep.subr.mxu0 0.0
      %970 = vmatpush2.msra.mxu0 0.0
      %971 = vmatprep.subr.mxu0 0.0
      %972 = vmatpush2.msra.mxu0 0.0
      %973 = vmatprep.subr.mxu0 0.0
      %974 = vmatpush2.msra.mxu0 0.0
      %975 = vmatprep.subr.mxu0 0.0
      %976 = vmatpush2.msra.mxu0 0.0
      %977 = vmatprep.subr.mxu0 0.0
      %978 = vmatpush2.msra.mxu0 0.0
      %979 = vmatprep.subr.mxu0 0.0
      %980 = vmatpush2.msra.mxu0 0.0
      %981 = vmatprep.subr.mxu0 0.0
      %982 = vmatpush2.msra.mxu0 0.0
      %983 = vmatprep.subr.mxu0 0.0
      %984 = vmatpush2.msra.mxu0 0.0
      %985 = vmatprep.subr.mxu0 0.0
      %986 = vmatpush2.msra.mxu0 0.0
      %987 = vmatprep.subr.mxu0 0.0
      %988 = vmatpush2.msra.mxu0 0.0
      %989 = vmatprep.subr.mxu0 0.0
      %990 = vmatpush2.msra.mxu0 0.0
      %991 = vmatprep.subr.mxu0 0.0
      %992 = vmatpush2.msra.mxu0 0.0
      %993 = vmatprep.subr.mxu0 0.0
      %994 = vmatpush2.msra.mxu0 0.0
      %995 = vmatprep.subr.mxu0 0.0
      %996 = vmatpush2.msra.mxu0 0.0
      %997 = vmatprep.mubr.f32.mxu0 0.0
      %998 = vmatmul.mubr.f32.gmra.mxu0 %v922
      %v999 = vpop.f32.mrf.mxu0
      %v1000 = vadd.f32 %v903, %v999
      %v1001 = vpop.f32.mrf.mxu0
      %1002 = vmatprep.mubr.f32.mxu0 0.0
      %1003 = vmatmul.mubr.f32.gmra.mxu0 %v925
      %v1004 = vpop.f32.mrf.mxu0
      %v1005 = vadd.f32 %v908, %v1004
      %v1006 = vpop.f32.mrf.mxu0
      %1007 = vmatprep.mubr.f32.mxu0 0.0
      %1008 = vmatmul.mubr.f32.gmra.mxu0 %v928
      %v1009 = vpop.f32.mrf.mxu0
      %v1010 = vadd.f32 %v913, %v1009
      %v1011 = vpop.f32.mrf.mxu0
      %1012 = vmatprep.mubr.f32.mxu0 0.0
      %1013 = vmatmul.mubr.f32.gmra.mxu0 %v931
      %v1014 = vpop.f32.mrf.mxu0
      %v1015 = vadd.f32 %v918, %v1014
      %v1016 = vpop.f32.mrf.mxu0
      %1017 = vdwg.mxu0
      %v1018 = vld [vmem:[%s7 + $0x3] sm:$0x1]
      %v1019 = vlaneseq
      %v1020 = vshrl.u32 %v1019, 7
      %v1021 = vsub.s32 0, %v1020
      %v1022 = vrot.slane %v1018, %v1021
      %v1023 = vadd.f32 %v1000, %v1022
      %v1024 = vadd.f32 %v1005, %v1022
      %v1025 = vadd.f32 %v1010, %v1022
      %v1026 = vadd.f32 %v1015, %v1022
      %v1027 = vmax.f32 %v1023, 0.0
      %v1028 = vmax.f32 %v1024, 0.0
      %v1029 = vmax.f32 %v1025, 0.0
      %v1030 = vmax.f32 %v1026, 0.0
      %v1031 = vld [vmem:[%s6] sm:$0xff]
      %v1032 = vld [vmem:[%s6 + $0x8] sm:$0xff]
      %v1033 = vld [vmem:[%s6 + $0x10] sm:$0xff]
      %v1034 = vld [vmem:[%s6 + $0x18] sm:$0xff]
      %v1035 = vld [vmem:[%s6 + $0x20] sm:$0xff]
      %v1036 = vld [vmem:[%s6 + $0x28] sm:$0xff]
      %v1037 = vld [vmem:[%s6 + $0x30] sm:$0xff]
      %v1038 = vld [vmem:[%s6 + $0x38] sm:$0xff]
      %v1039 = vld [vmem:[%s7 + $0x4] sm:$0x1]
      %v1040 = vlaneseq
      %v1041 = vshrl.u32 %v1040, 7
      %v1042 = vsub.s32 0, %v1041
      %v1043 = vrot.slane %v1039, %v1042
      %vm1044 = vcmask 523264
      %v1046 = vsel %vm1044, %v1027, 0
      %v1049 = vsel %vm1044, %v1028, 0
      %v1052 = vsel %vm1044, %v1029, 0
      %v1055 = vsel %vm1044, %v1030, 0
      %1057 = vmatprep.subr.mxu0 0.0
      %1058 = vmatpush1.msra.mxu0 0.0
      %1059 = vmatprep.subr.mxu0 0.0
      %1060 = vmatpush1.msra.mxu0 0.0
      %1061 = vmatprep.subr.mxu0 0.0
      %1062 = vmatpush1.msra.mxu0 0.0
      %1063 = vmatprep.subr.mxu0 0.0
      %1064 = vmatpush1.msra.mxu0 0.0
      %1065 = vmatprep.subr.mxu0 0.0
      %1066 = vmatpush1.msra.mxu0 0.0
      %1067 = vmatprep.subr.mxu0 0.0
      %1068 = vmatpush1.msra.mxu0 0.0
      %1069 = vmatprep.subr.mxu0 0.0
      %1070 = vmatpush1.msra.mxu0 0.0
      %1071 = vmatprep.subr.mxu0 0.0
      %1072 = vmatpush1.msra.mxu0 0.0
      %1073 = vmatprep.subr.mxu0 0.0
      %1074 = vmatpush1.msra.mxu0 %v1038
      %1075 = vmatprep.subr.mxu0 0.0
      %1076 = vmatpush1.msra.mxu0 %v1037
      %1077 = vmatprep.subr.mxu0 0.0
      %1078 = vmatpush1.msra.mxu0 %v1036
      %1079 = vmatprep.subr.mxu0 0.0
      %1080 = vmatpush1.msra.mxu0 %v1035
      %1081 = vmatprep.subr.mxu0 0.0
      %1082 = vmatpush1.msra.mxu0 %v1034
      %1083 = vmatprep.subr.mxu0 0.0
      %1084 = vmatpush1.msra.mxu0 %v1033
      %1085 = vmatprep.subr.mxu0 0.0
      %1086 = vmatpush1.msra.mxu0 %v1032
      %1087 = vmatprep.subr.mxu0 0.0
      %1088 = vmatpush1.msra.mxu0 %v1031
      %1089 = vmatprep.subr.mxu0 0.0
      %1090 = vmatpush2.msra.mxu0 0.0
      %1091 = vmatprep.subr.mxu0 0.0
      %1092 = vmatpush2.msra.mxu0 0.0
      %1093 = vmatprep.subr.mxu0 0.0
      %1094 = vmatpush2.msra.mxu0 0.0
      %1095 = vmatprep.subr.mxu0 0.0
      %1096 = vmatpush2.msra.mxu0 0.0
      %1097 = vmatprep.subr.mxu0 0.0
      %1098 = vmatpush2.msra.mxu0 0.0
      %1099 = vmatprep.subr.mxu0 0.0
      %1100 = vmatpush2.msra.mxu0 0.0
      %1101 = vmatprep.subr.mxu0 0.0
      %1102 = vmatpush2.msra.mxu0 0.0
      %1103 = vmatprep.subr.mxu0 0.0
      %1104 = vmatpush2.msra.mxu0 0.0
      %1105 = vmatprep.subr.mxu0 0.0
      %1106 = vmatpush2.msra.mxu0 0.0
      %1107 = vmatprep.subr.mxu0 0.0
      %1108 = vmatpush2.msra.mxu0 0.0
      %1109 = vmatprep.subr.mxu0 0.0
      %1110 = vmatpush2.msra.mxu0 0.0
      %1111 = vmatprep.subr.mxu0 0.0
      %1112 = vmatpush2.msra.mxu0 0.0
      %1113 = vmatprep.subr.mxu0 0.0
      %1114 = vmatpush2.msra.mxu0 0.0
      %1115 = vmatprep.subr.mxu0 0.0
      %1116 = vmatpush2.msra.mxu0 0.0
      %1117 = vmatprep.subr.mxu0 0.0
      %1118 = vmatpush2.msra.mxu0 0.0
      %1119 = vmatprep.subr.mxu0 0.0
      %1120 = vmatpush2.msra.mxu0 0.0
      %1121 = vmatprep.mubr.f32.mxu0 0.0
      %1122 = vmatmul.mubr.f32.gmra.mxu0 %v1046
      %v1123 = vpop.f32.mrf.mxu0
      %v1124 = vadd.f32 %v1043, %v1123
      %v1125 = vpop.f32.mrf.mxu0
      %1126 = vmatprep.mubr.f32.mxu0 0.0
      %1127 = vmatmul.mubr.f32.gmra.mxu0 %v1049
      %v1128 = vpop.f32.mrf.mxu0
      %v1129 = vadd.f32 %v1043, %v1128
      %v1130 = vpop.f32.mrf.mxu0
      %1131 = vmatprep.mubr.f32.mxu0 0.0
      %1132 = vmatmul.mubr.f32.gmra.mxu0 %v1052
      %v1133 = vpop.f32.mrf.mxu0
      %v1134 = vadd.f32 %v1043, %v1133
      %v1135 = vpop.f32.mrf.mxu0
      %1136 = vmatprep.mubr.f32.mxu0 0.0
      %1137 = vmatmul.mubr.f32.gmra.mxu0 %v1055
      %v1138 = vpop.f32.mrf.mxu0
      %v1139 = vadd.f32 %v1043, %v1138
      %v1140 = vpop.f32.mrf.mxu0
      %1141 = vdwg.mxu0
      %v1142 = vmax.f32 %v1124, 0.0
      %v1143 = vmax.f32 %v1129, 0.0
      %v1144 = vmax.f32 %v1134, 0.0
      %v1145 = vmax.f32 %v1139, 0.0
      %1146 = vst.msk [vmem:[%s329] sm:$0xff] %vm562, %v1142
      %1147 = vst.msk [vmem:[%s329 + $0x8] sm:$0xff] %vm562, %v1143
      %1148 = vst.msk [vmem:[%s329 + $0x10] sm:$0xff] %vm562, %v1144
      %1149 = vst.msk [vmem:[%s329 + $0x18] sm:$0xff] %vm562, %v1145
      %s1150 = smul.u32 4, %s19
      %p1151 = scmp.lt.s32.totalorder %s1150, 7
      %s1152 = scalar_select %p1151, %s1150, 7
      %s1153 = smul.addr %s1152, 8
      %s1154 = scalar_lea.vmem %s8, %s1153
      // Predicated region
      $region53: #{tpu_custom_call.1} parent=51 // pred_check
        %p1155 = pneg %p215
      $region54: #{tpu_custom_call.1} parent=51 // pred_check_branch
        %1157 = sbr.rel (%p1155) target = $region56
      $region55: #{tpu_custom_call.1} parent=51 // pred_region
        %s1158 = smul.u32 4, %s19
      $region56: #{tpu_custom_call.1} parent=51 // pred_fallthru
        _
    $region52: #{tpu_custom_call.1} parent=5 // pred_fallthru
      _
    %p1159 = scmp.le.s32.totalorder 2, %s14
    // Predicated region
    $region57: #{tpu_custom_call.1} parent=5 // pred_check
      %p1160 = pneg %p1159
    $region58: #{tpu_custom_call.1} parent=5 // pred_check_branch
      %1162 = sbr.rel (%p1160) target = $region60
    $region59: #{tpu_custom_call.1} parent=5 // pred_region
      %s1163 = ssub.s32 %s14, 2
      // Predicated region
      $region61: #{tpu_custom_call.1} parent=59 // pred_check
        %p1164 = pneg %p221
      $region62: #{tpu_custom_call.1} parent=59 // pred_check_branch
        %1166 = sbr.rel (%p1164) target = $region64
      $region63: #{tpu_custom_call.1} parent=59 // pred_region
        %s1167 = smul.u32 4, %s20
        %p1168 = scmp.lt.s32.totalorder %s1167, 7
        %s1169 = scalar_select %p1168, %s1167, 7
        %s1170 = smul.addr %s1169, 8
        %s1171 = scalar_lea.vmem %s8, %s1170
      $region64: #{tpu_custom_call.1} parent=59 // pred_fallthru
        _
    $region60: #{tpu_custom_call.1} parent=5 // pred_fallthru
      _
  $region6: #{tpu_custom_call.1} parent=0 // loop_footer
    %s18 = sadd.s32 1, %s14
  $region7: #{tpu_custom_call.1} parent=0 // loop_footer_branch
    %13 = sbr.rel target = $region3
  $region8: #{tpu_custom_call.1} parent=0 // loop_exit
    _

</llo_original>
